<compile_context>
chip_gen: v7x
topology: tpu7x:2x2x1
jax: 0.10.0
libtpu: 0.0.40
codegen_flags: <defaults>
</compile_context>

<pallas_src>
import functools
import math

import jax
import jax.numpy as jnp
from jax import lax
from jax.experimental import pallas as pl
from jax.experimental.pallas import tpu as pltpu


# ----------------------------- config ---------------------------------------
BATCH = 2
SEQ = 8
HIDDEN = 256
NUM_HEADS = 2
NUM_KV_HEADS = 2          # must equal NUM_HEADS (repeat_kv result is discarded)
HEAD_DIM = HIDDEN // NUM_HEADS
ROPE_THETA = 10000.0
SCALING_FACTOR = 1
ATTN_DROPOUT_PROB = 0.1   # identity at inference (training=False)

NEG_INF = -1e30           # safe large-negative for masking


# ------------------------- fused forward kernel ------------------------------
def _fused_attention_kernel(x_ref, wqkv_ref, wo_ref, cos_ref, sin_ref, o_ref, *,
                            seq, num_heads, head_dim):
    """QKV projection + RoPE + stacked (batch*heads) causal attention + o_proj
    for the whole input slab in a single invocation; everything VMEM-resident."""
    x = x_ref[...]                    # (B*S, H)  bf16
    cos = cos_ref[...]                # (B*S, D)  f32
    sin_s = sin_ref[...]              # (B*S, D)  f32 (rotate_half sign folded in)

    s, nh, d = seq, num_heads, head_dim
    n_rows, hid = x.shape             # B*S, H

    # Fused QKV projection: one wide MXU matmul, f32 accumulation; weight is in
    # PyTorch (out, in) layout and consumed transposed natively (no weight.T).
    # The 1/sqrt(scaling*head_dim) score scale is pre-folded into the q rows.
    qkv = lax.dot_general(x, wqkv_ref[...], (((1,), (1,)), ((), ())),
                          preferred_element_type=jnp.float32)       # (B*S, 3H)

    # RoPE per head (f32), then stack heads along rows -> row order (head, b, s).
    q_parts, k_parts, v_parts = [], [], []
    for h in range(nh):
        q_h = qkv[:, h * d:(h + 1) * d]
        k_h = qkv[:, hid + h * d:hid + (h + 1) * d]
        v_h = qkv[:, 2 * hid + h * d:2 * hid + (h + 1) * d]
        # rotate_half(x) == roll(x, D/2) with the first half negated; the
        # negation lives in sin_s, so RoPE is just two muls + one XLU roll.
        q_parts.append(q_h * cos + pltpu.roll(q_h, shift=d // 2, axis=1) * sin_s)
        k_parts.append(k_h * cos + pltpu.roll(k_h, shift=d // 2, axis=1) * sin_s)
        v_parts.append(v_h)
    q_stack = jnp.concatenate(q_parts, axis=0).astype(jnp.bfloat16)  # (NH*B*S, D)
    k_stack = jnp.concatenate(k_parts, axis=0).astype(jnp.bfloat16)
    v_stack = jnp.concatenate(v_parts, axis=0).astype(jnp.bfloat16)

    # One QK^T for all (head, batch) groups; K consumed transposed natively.
    scores = lax.dot_general(q_stack, k_stack, (((1,), (1,)), ((), ())),
                             preferred_element_type=jnp.float32)     # (G*S, G*S)

    # Combined block-diagonal (same head/batch group) + causal mask from iota.
    n_stack = nh * n_rows
    row = lax.broadcasted_iota(jnp.int32, (n_stack, n_stack), 0)
    col = lax.broadcasted_iota(jnp.int32, (n_stack, n_stack), 1)
    if (s & (s - 1)) == 0:            # power-of-two seq: shifts, no vector div
        sh = s.bit_length() - 1
        same_group = (row >> sh) == (col >> sh)
    else:
        same_group = (row // s) == (col // s)
    keep = same_group & (row >= col)
    scores = jnp.where(keep, scores, NEG_INF)

    # Numerically stable softmax over keys; exact divide (EUP is idle anyway).
    scores = scores - jnp.max(scores, axis=-1, keepdims=True)
    e = jnp.exp(scores)
    p = (e / jnp.sum(e, axis=-1, keepdims=True)).astype(jnp.bfloat16)
    # TODO(synk): attention-prob dropout omitted (identity at inference).

    attn = jnp.dot(p, v_stack, preferred_element_type=jnp.float32)   # (NH*B*S, D)

    # Un-stack heads back into the lane-dense (B*S, H) layout for the o_proj.
    attn_flat = jnp.concatenate(
        [attn[h * n_rows:(h + 1) * n_rows, :] for h in range(nh)],
        axis=1).astype(jnp.bfloat16)                                  # (B*S, H)

    out = lax.dot_general(attn_flat, wo_ref[...], (((1,), (1,)), ((), ())),
                          preferred_element_type=jnp.float32)
    o_ref[...] = out.astype(o_ref.dtype)


# ----------------------------- wrapper ----------------------------------------
def prepare_params(wq, wk, wv, wo):
    """Done ONCE: fold the score scale into wq (RoPE is linear), fuse q/k/v
    weights into a single (3H, H) matrix, cast everything to bf16."""
    scale = 1.0 / math.sqrt(SCALING_FACTOR * HEAD_DIM)
    wqkv = jnp.concatenate([wq * scale, wk, wv], axis=0).astype(jnp.bfloat16)
    return {"wqkv": wqkv, "wo": wo.astype(jnp.bfloat16)}


def carformer_attention_forward(hidden_states, params, position_ids):
    """Mirrors CarFormerAttention.forward (inference path, apply_rotary=True,
    causal mask, attention_bias=False, pretraining_tp=1)."""
    assert NUM_KV_HEADS == NUM_HEADS, (
        "reference discards repeat_kv(); only valid when kv_heads == heads")
    b, s, h = hidden_states.shape
    d = HEAD_DIM

    # Llama rotary tables (tiny elementwise trig; stays in the jitted wrapper).
    inv_freq = 1.0 / (ROPE_THETA ** (jnp.arange(0, d, 2, dtype=jnp.float32) / d))
    freqs = position_ids.astype(jnp.float32)[..., None] * inv_freq[None, None, :]
    emb = jnp.concatenate([freqs, freqs], axis=-1)                    # (B, S, D)
    cos = jnp.cos(emb).reshape(b * s, d)
    # rotate_half sign (-1 on the first half) folded into sin ONCE here.
    sign = jnp.where(jnp.arange(d) < d // 2, -1.0, 1.0).astype(jnp.float32)
    sin_signed = (jnp.sin(emb) * sign).reshape(b * s, d)

    # Fold batch into rows outside the kernel (free XLA reshape), cast to bf16.
    x2d = hidden_states.reshape(b * s, h).astype(jnp.bfloat16)

    kernel = functools.partial(_fused_attention_kernel,
                               seq=s, num_heads=NUM_HEADS, head_dim=d)
    vmem = pl.BlockSpec(memory_space=pltpu.MemorySpace.VMEM)
    out2d = pl.pallas_call(
        kernel,
        out_shape=jax.ShapeDtypeStruct((b * s, h), hidden_states.dtype),
        in_specs=[vmem] * 5,
        out_specs=vmem,
    )(x2d, params["wqkv"], params["wo"], cos, sin_signed)
    return out2d.reshape(b, s, h)


# -------------------------- pure-JAX reference --------------------------------
def _reference_forward(hidden_states, wq, wk, wv, wo, position_ids):
    b, s, h = hidden_states.shape
    d = HEAD_DIM
    hi = lax.Precision.HIGHEST

    def proj(x, w):
        return jnp.einsum("bsh,oh->bso", x, w, precision=hi)

    q = proj(hidden_states, wq).reshape(b, s, NUM_HEADS, d).transpose(0, 2, 1, 3)
    k = proj(hidden_states, wk).reshape(b, s, NUM_KV_HEADS, d).transpose(0, 2, 1, 3)
    v = proj(hidden_states, wv).reshape(b, s, NUM_KV_HEADS, d).transpose(0, 2, 1, 3)

    inv_freq = 1.0 / (ROPE_THETA ** (jnp.arange(0, d, 2, dtype=jnp.float32) / d))
    freqs = position_ids.astype(jnp.float32)[..., None] * inv_freq[None, None, :]
    emb = jnp.concatenate([freqs, freqs], axis=-1)
    cos = jnp.cos(emb)[:, None, :, :]
    sin = jnp.sin(emb)[:, None, :, :]
    rot = lambda x: jnp.concatenate([-x[..., d // 2:], x[..., :d // 2]], axis=-1)
    q = q * cos + rot(q) * sin
    k = k * cos + rot(k) * sin

    scores = jnp.einsum("bhqd,bhkd->bhqk", q, k, precision=hi)
    scores = scores / math.sqrt(SCALING_FACTOR * d)
    mask = jnp.triu(jnp.full((s, s), jnp.finfo(jnp.float32).min, jnp.float32), k=1)
    scores = scores + mask[None, None]
    p = jax.nn.softmax(scores, axis=-1)
    attn = jnp.einsum("bhqk,bhkd->bhqd", p, v, precision=hi)
    attn = attn.transpose(0, 2, 1, 3).reshape(b, s, h)
    return jnp.einsum("bsh,oh->bso", attn, wo, precision=hi)


# ----------------------------- main ------------------------------------------
if __name__ == "__main__":
    key = jax.random.PRNGKey(0)
    k_x, k_q, k_k, k_v, k_o = jax.random.split(key, 5)

    hidden_states = jax.random.normal(k_x, (BATCH, SEQ, HIDDEN), dtype=jnp.float32)

    # PyTorch nn.Linear weight shape: (out, in), no bias (attention_bias=False).
    wq = 0.02 * jax.random.normal(k_q, (NUM_HEADS * HEAD_DIM, HIDDEN), jnp.float32)
    wk = 0.02 * jax.random.normal(k_k, (NUM_KV_HEADS * HEAD_DIM, HIDDEN), jnp.float32)
    wv = 0.02 * jax.random.normal(k_v, (NUM_KV_HEADS * HEAD_DIM, HIDDEN), jnp.float32)
    wo = 0.02 * jax.random.normal(k_o, (HIDDEN, HIDDEN), jnp.float32)

    params = prepare_params(wq, wk, wv, wo)

    position_ids = jnp.broadcast_to(
        jnp.arange(SEQ, dtype=jnp.int32)[None, :], (BATCH, SEQ))

    fwd = jax.jit(carformer_attention_forward)
    out = fwd(hidden_states, params, position_ids)
    jax.block_until_ready(out)

    assert out.shape == (BATCH, SEQ, HIDDEN)

    # Numerical check vs. f32 HIGHEST-precision reference.  Tolerance reflects
    # bf16 matmul inputs (f32 accumulation) in the kernel.
    ref = _reference_forward(hidden_states, wq, wk, wv, wo, position_ids)
    max_err = float(jnp.max(jnp.abs(out - ref)))
    assert jnp.allclose(out, ref, rtol=3e-2, atol=1e-2), (
        "max abs err %e" % max_err)

    print("KERNEL_OK")
</pallas_src>

<mosaic_0001>
module attributes {stable_mosaic.version = 11 : i64} {
  func.func @_fused_attention_kernel(%arg0: memref<16x256xbf16, #tpu.memory_space<vmem>>, %arg1: memref<768x256xbf16, #tpu.memory_space<vmem>>, %arg2: memref<256x256xbf16, #tpu.memory_space<vmem>>, %arg3: memref<16x128xf32, #tpu.memory_space<vmem>>, %arg4: memref<16x128xf32, #tpu.memory_space<vmem>>, %arg5: memref<16x256xf32, #tpu.memory_space<vmem>>) attributes {dimension_semantics = [], scalar_prefetch = 0 : i64, scratch_operands = 0 : i64, tpu.core_type = #tpu.core_type<tc>} {
    %c0 = arith.constant 0 : index
    %c0_0 = arith.constant 0 : index
    %0 = vector.load %arg0[%c0, %c0_0] : memref<16x256xbf16, #tpu.memory_space<vmem>>, vector<16x256xbf16>
    %c0_1 = arith.constant 0 : index
    %c0_2 = arith.constant 0 : index
    %1 = vector.load %arg3[%c0_1, %c0_2] : memref<16x128xf32, #tpu.memory_space<vmem>>, vector<16x128xf32>
    %c0_3 = arith.constant 0 : index
    %c0_4 = arith.constant 0 : index
    %2 = vector.load %arg4[%c0_3, %c0_4] : memref<16x128xf32, #tpu.memory_space<vmem>>, vector<16x128xf32>
    %c0_5 = arith.constant 0 : index
    %c0_6 = arith.constant 0 : index
    %3 = vector.load %arg1[%c0_5, %c0_6] : memref<768x256xbf16, #tpu.memory_space<vmem>>, vector<768x256xbf16>
    %cst = arith.constant dense<0.000000e+00> : vector<16x768xf32>
    %4 = tpu.matmul %0, %3, %cst {dimension_numbers = #tpu.dot_dimension_numbers<[1], [1], [0], [0], [0, 0, 1, 0], [], []>} : vector<16x256xbf16>, vector<768x256xbf16>, vector<16x768xf32> -> vector<16x768xf32>
    %5 = vector.extract_strided_slice %4 {offsets = [0, 0], sizes = [16, 128], strides = [1, 1]} : vector<16x768xf32> to vector<16x128xf32>
    %6 = vector.extract_strided_slice %4 {offsets = [0, 256], sizes = [16, 128], strides = [1, 1]} : vector<16x768xf32> to vector<16x128xf32>
    %7 = vector.extract_strided_slice %4 {offsets = [0, 512], sizes = [16, 128], strides = [1, 1]} : vector<16x768xf32> to vector<16x128xf32>
    %8 = arith.mulf %5, %1 : vector<16x128xf32>
    %c64_i32 = arith.constant 64 : i32
    %9 = tpu.dynamic_rotate %5 by %c64_i32 dim 1 : vector<16x128xf32>, i32 -> vector<16x128xf32>
    %10 = arith.mulf %9, %2 : vector<16x128xf32>
    %11 = arith.addf %8, %10 : vector<16x128xf32>
    %12 = arith.mulf %6, %1 : vector<16x128xf32>
    %c64_i32_7 = arith.constant 64 : i32
    %13 = tpu.dynamic_rotate %6 by %c64_i32_7 dim 1 : vector<16x128xf32>, i32 -> vector<16x128xf32>
    %14 = arith.mulf %13, %2 : vector<16x128xf32>
    %15 = arith.addf %12, %14 : vector<16x128xf32>
    %16 = vector.extract_strided_slice %4 {offsets = [0, 128], sizes = [16, 128], strides = [1, 1]} : vector<16x768xf32> to vector<16x128xf32>
    %17 = vector.extract_strided_slice %4 {offsets = [0, 384], sizes = [16, 128], strides = [1, 1]} : vector<16x768xf32> to vector<16x128xf32>
    %18 = vector.extract_strided_slice %4 {offsets = [0, 640], sizes = [16, 128], strides = [1, 1]} : vector<16x768xf32> to vector<16x128xf32>
    %19 = arith.mulf %16, %1 : vector<16x128xf32>
    %c64_i32_8 = arith.constant 64 : i32
    %20 = tpu.dynamic_rotate %16 by %c64_i32_8 dim 1 : vector<16x128xf32>, i32 -> vector<16x128xf32>
    %21 = arith.mulf %20, %2 : vector<16x128xf32>
    %22 = arith.addf %19, %21 : vector<16x128xf32>
    %23 = arith.mulf %17, %1 : vector<16x128xf32>
    %c64_i32_9 = arith.constant 64 : i32
    %24 = tpu.dynamic_rotate %17 by %c64_i32_9 dim 1 : vector<16x128xf32>, i32 -> vector<16x128xf32>
    %25 = arith.mulf %24, %2 : vector<16x128xf32>
    %26 = arith.addf %23, %25 : vector<16x128xf32>
    %27 = tpu.concatenate %11, %22 in 0 : vector<16x128xf32>, vector<16x128xf32> -> vector<32x128xf32>
    %28 = arith.truncf %27 : vector<32x128xf32> to vector<32x128xbf16>
    %29 = tpu.concatenate %15, %26 in 0 : vector<16x128xf32>, vector<16x128xf32> -> vector<32x128xf32>
    %30 = arith.truncf %29 : vector<32x128xf32> to vector<32x128xbf16>
    %31 = tpu.concatenate %7, %18 in 0 : vector<16x128xf32>, vector<16x128xf32> -> vector<32x128xf32>
    %32 = arith.truncf %31 : vector<32x128xf32> to vector<32x128xbf16>
    %cst_10 = arith.constant dense<0.000000e+00> : vector<32x32xf32>
    %33 = tpu.matmul %28, %30, %cst_10 {dimension_numbers = #tpu.dot_dimension_numbers<[1], [1], [0], [0], [0, 0, 1, 0], [], []>} : vector<32x128xbf16>, vector<32x128xbf16>, vector<32x32xf32> -> vector<32x32xf32>
    %34 = tpu.iota {dimensions = array<i32: 0>} : vector<32x32xi32>
    %35 = tpu.iota {dimensions = array<i32: 1>} : vector<32x32xi32>
    %c3_i32 = arith.constant 3 : i32
    %36 = vector.broadcast %c3_i32 : i32 to vector<32x32xi32>
    %37 = arith.shrsi %34, %36 : vector<32x32xi32>
    %c3_i32_11 = arith.constant 3 : i32
    %38 = vector.broadcast %c3_i32_11 : i32 to vector<32x32xi32>
    %39 = arith.shrsi %35, %38 : vector<32x32xi32>
    %40 = arith.cmpi eq, %37, %39 : vector<32x32xi32>
    %41 = arith.cmpi sge, %34, %35 : vector<32x32xi32>
    %42 = arith.andi %40, %41 : vector<32x32xi1>
    %cst_12 = arith.constant -1.000000e+30 : f32
    %43 = vector.broadcast %cst_12 : f32 to vector<32x32xf32>
    %44 = arith.select %42, %33, %43 : vector<32x32xi1>, vector<32x32xf32>
    %cst_13 = arith.constant dense<0xFF800000> : vector<32xf32>
    %45 = vector.multi_reduction <maximumf>, %44, %cst_13 [1] : vector<32x32xf32> to vector<32xf32>
    %46 = vector.shape_cast %45 : vector<32xf32> to vector<32x1xf32>
    %47 = vector.broadcast %46 : vector<32x1xf32> to vector<32x32xf32>
    %48 = arith.subf %44, %47 : vector<32x32xf32>
    %49 = math.exp %48 : vector<32x32xf32>
    %cst_14 = arith.constant dense<0.000000e+00> : vector<32xf32>
    %50 = vector.multi_reduction <add>, %49, %cst_14 [1] : vector<32x32xf32> to vector<32xf32>
    %51 = vector.shape_cast %50 : vector<32xf32> to vector<32x1xf32>
    %52 = vector.broadcast %51 : vector<32x1xf32> to vector<32x32xf32>
    %53 = arith.divf %49, %52 : vector<32x32xf32>
    %54 = arith.truncf %53 : vector<32x32xf32> to vector<32x32xbf16>
    %cst_15 = arith.constant dense<0.000000e+00> : vector<32x128xf32>
    %55 = tpu.matmul %54, %32, %cst_15 {dimension_numbers = #tpu.dot_dimension_numbers<[1], [0], [0], [1], [0, 0, 1, 1], [], []>} : vector<32x32xbf16>, vector<32x128xbf16>, vector<32x128xf32> -> vector<32x128xf32>
    %56 = vector.extract_strided_slice %55 {offsets = [0, 0], sizes = [16, 128], strides = [1, 1]} : vector<32x128xf32> to vector<16x128xf32>
    %57 = vector.extract_strided_slice %55 {offsets = [16, 0], sizes = [16, 128], strides = [1, 1]} : vector<32x128xf32> to vector<16x128xf32>
    %58 = tpu.concatenate %56, %57 in 1 : vector<16x128xf32>, vector<16x128xf32> -> vector<16x256xf32>
    %59 = arith.truncf %58 : vector<16x256xf32> to vector<16x256xbf16>
    %c0_16 = arith.constant 0 : index
    %c0_17 = arith.constant 0 : index
    %60 = vector.load %arg2[%c0_16, %c0_17] : memref<256x256xbf16, #tpu.memory_space<vmem>>, vector<256x256xbf16>
    %cst_18 = arith.constant dense<0.000000e+00> : vector<16x256xf32>
    %61 = tpu.matmul %59, %60, %cst_18 {dimension_numbers = #tpu.dot_dimension_numbers<[1], [1], [0], [0], [0, 0, 1, 0], [], []>} : vector<16x256xbf16>, vector<256x256xbf16>, vector<16x256xf32> -> vector<16x256xf32>
    %c0_19 = arith.constant 0 : index
    %c0_20 = arith.constant 0 : index
    %62 = vector.load %arg5[%c0_19, %c0_20] : memref<16x256xf32, #tpu.memory_space<vmem>>, vector<16x256xf32>
    tpu.vector_store %arg5[%c0_19, %c0_20], %61 {strides = array<i32>} : memref<16x256xf32, #tpu.memory_space<vmem>>, vector<16x256xf32>,
    return
  }
}

</mosaic_0001>

<llo_original>
// kernel: carformer_attention_forward.1
$region0: #{carformer_attention_forward.1}
  #allocation0 [shape = 'u32[]', space=smem, size = 0x4, offset = 0x4, fixed_abs, tag = 'smem constant byte address 0x4 - core index']
  #allocation1 [shape = 'u32[144,128]{1,0:T(1,128)}', space=vmem, size = 0x12000, scoped, tag = 'internal scratch']
  %s0 = inlined_call_operand.vmem [shape: bf16[16,256], index: 0, kind: input, shape index: {}]
  %s1 = inlined_call_operand.hbm [shape: bf16[768,256], index: 1, kind: input, shape index: {}]
  %s2 = inlined_call_operand.hbm [shape: bf16[256,256], index: 2, kind: input, shape index: {}]
  %s3 = inlined_call_operand.vmem [shape: f32[16,128], index: 3, kind: input, shape index: {}]
  %s4 = inlined_call_operand.vmem [shape: f32[16,128], index: 4, kind: input, shape index: {}]
  %s5 = inlined_call_operand.hbm [shape: f32[16,256], index: 5, kind: output, shape index: {}]
  %s6 = sld [smem:[#allocation0]]
  $region38: #{carformer_attention_forward.1} parent=0
    _
  %s8 = ssub.s32 1, %s6
  %s9 = scalar_select 0, %s8, %s6
  $region1: #{carformer_attention_forward.1} parent=0
    #allocation2 [shape = 'u8[393216]{0}', space=vmem, size = 0x60000, scoped, tag = 'input window, operand 1, single buffered']
    #allocation3 [shape = 's32[1]{0}', space=sflag, size = 0x4, scoped, tag = 'scoped memory for carformer_attention_forward.1']
    #allocation4 [shape = 's32[1]{0}', space=sflag, size = 0x4, scoped, tag = 'scoped memory for carformer_attention_forward.1']
    #allocation5 [shape = 'u8[131072]{0}', space=vmem, size = 0x20000, scoped, tag = 'input window, operand 2, single buffered']
    #allocation6 [shape = 's32[1]{0}', space=sflag, size = 0x4, scoped, tag = 'scoped memory for carformer_attention_forward.1']
    #allocation7 [shape = 'u8[16384]{0}', space=vmem, size = 0x4000, scoped, tag = 'output window, operand 0, single buffered']
    %10 = vsyncpa [#allocation3], 0
    %11 = vsyncpa [#allocation6], 0
    %12 = vsyncpa [#allocation4], 0
    // Predicated region
    $region2: #{carformer_attention_forward.1} parent=1 // pred_check
      _
    $region3: #{carformer_attention_forward.1} parent=1 // pred_check_branch
      %14 = sbr.rel (0) target = $region5
    $region4: #{carformer_attention_forward.1} parent=1 // pred_region
      _
    $region5: #{carformer_attention_forward.1} parent=1 // pred_fallthru
      _
    // Predicated region
    $region6: #{carformer_attention_forward.1} parent=1 // pred_check
      _
    $region7: #{carformer_attention_forward.1} parent=1 // pred_check_branch
      %16 = sbr.rel (0) target = $region9
    $region8: #{carformer_attention_forward.1} parent=1 // pred_region
      %s18 = ssub.s32 12288, 12288
      %19 = vsyncadd [#allocation3], %s18
      %s20 = sshll.u32 [#allocation2], 4
      %s21 = int_to_ptr.vmem [resolvable:$true] %s20
      %26 = dma.hbm_to_vmem [thread:$0]  %s1, 12288, %s21, [#allocation3], 128, 128, 8
    $region9: #{carformer_attention_forward.1} parent=1 // pred_fallthru
      _
    // Predicated region
    $region10: #{carformer_attention_forward.1} parent=1 // pred_check
      _
    $region11: #{carformer_attention_forward.1} parent=1 // pred_check_branch
      %28 = sbr.rel (0) target = $region13
    $region12: #{carformer_attention_forward.1} parent=1 // pred_region
      %s30 = ssub.s32 4096, 4096
      %31 = vsyncadd [#allocation6], %s30
      %s32 = sshll.u32 [#allocation5], 4
      %s33 = int_to_ptr.vmem [resolvable:$true] %s32
      %38 = dma.hbm_to_vmem [thread:$0]  %s2, 4096, %s33, [#allocation6], 128, 128, 8
    $region13: #{carformer_attention_forward.1} parent=1 // pred_fallthru
      _
    // Predicated region
    $region14: #{carformer_attention_forward.1} parent=1 // pred_check
      _
    $region15: #{carformer_attention_forward.1} parent=1 // pred_check_branch
      %40 = sbr.rel (0) target = $region17
    $region16: #{carformer_attention_forward.1} parent=1 // pred_region
      _
    $region17: #{carformer_attention_forward.1} parent=1 // pred_fallthru
      _
    // Predicated region
    $region18: #{carformer_attention_forward.1} parent=1 // pred_check
      _
    $region19: #{carformer_attention_forward.1} parent=1 // pred_check_branch
      %42 = sbr.rel (0) target = $region21
    $region20: #{carformer_attention_forward.1} parent=1 // pred_region
      _
    $region21: #{carformer_attention_forward.1} parent=1 // pred_fallthru
      _
    // Predicated region
    $region22: #{carformer_attention_forward.1} parent=1 // pred_check
      _
    $region23: #{carformer_attention_forward.1} parent=1 // pred_check_branch
      %44 = sbr.rel (0) target = $region25
    $region24: #{carformer_attention_forward.1} parent=1 // pred_region
      %45 = dma.done [#allocation3], 12288
    $region25: #{carformer_attention_forward.1} parent=1 // pred_fallthru
      _
    // Predicated region
    $region26: #{carformer_attention_forward.1} parent=1 // pred_check
      _
    $region27: #{carformer_attention_forward.1} parent=1 // pred_check_branch
      %47 = sbr.rel (0) target = $region29
    $region28: #{carformer_attention_forward.1} parent=1 // pred_region
      %48 = dma.done [#allocation6], 4096
    $region29: #{carformer_attention_forward.1} parent=1 // pred_fallthru
      _
    %v50 = vld [vmem:[%s0] sm:$0xff]
    %v51 = vld [vmem:[%s0 + $0x8] sm:$0xff]
    %v52 = vld [vmem:[%s3] sm:$0xff]
    %v53 = vld [vmem:[%s3 + $0x8] sm:$0xff]
    %v54 = vld [vmem:[%s4] sm:$0xff]
    %v55 = vld [vmem:[%s4 + $0x8] sm:$0xff]
    %v56 = vld [vmem:[#allocation2] sm:$0xff]
    %v57 = vld [vmem:[#allocation2 + $0x8] sm:$0xff]
    %v58 = vld [vmem:[#allocation2 + $0x10] sm:$0xff]
    %v59 = vld [vmem:[#allocation2 + $0x18] sm:$0xff]
    %v60 = vld [vmem:[#allocation2 + $0x20] sm:$0xff]
    %v61 = vld [vmem:[#allocation2 + $0x28] sm:$0xff]
    %v62 = vld [vmem:[#allocation2 + $0x30] sm:$0xff]
    %v63 = vld [vmem:[#allocation2 + $0x38] sm:$0xff]
    %v64 = vld [vmem:[#allocation2 + $0x40] sm:$0xff]
    %v65 = vld [vmem:[#allocation2 + $0x48] sm:$0xff]
    %v66 = vld [vmem:[#allocation2 + $0x50] sm:$0xff]
    %v67 = vld [vmem:[#allocation2 + $0x58] sm:$0xff]
    %v68 = vld [vmem:[#allocation2 + $0x60] sm:$0xff]
    %v69 = vld [vmem:[#allocation2 + $0x68] sm:$0xff]
    %v70 = vld [vmem:[#allocation2 + $0x70] sm:$0xff]
    %v71 = vld [vmem:[#allocation2 + $0x78] sm:$0xff]
    %v72 = vld [vmem:[#allocation2 + $0x80] sm:$0xff]
    %v73 = vld [vmem:[#allocation2 + $0x88] sm:$0xff]
    %v74 = vld [vmem:[#allocation2 + $0x90] sm:$0xff]
    %v75 = vld [vmem:[#allocation2 + $0x98] sm:$0xff]
    %v76 = vld [vmem:[#allocation2 + $0xa0] sm:$0xff]
    %v77 = vld [vmem:[#allocation2 + $0xa8] sm:$0xff]
    %v78 = vld [vmem:[#allocation2 + $0xb0] sm:$0xff]
    %v79 = vld [vmem:[#allocation2 + $0xb8] sm:$0xff]
    %v80 = vld [vmem:[#allocation2 + $0xc0] sm:$0xff]
    %v81 = vld [vmem:[#allocation2 + $0xc8] sm:$0xff]
    %v82 = vld [vmem:[#allocation2 + $0xd0] sm:$0xff]
    %v83 = vld [vmem:[#allocation2 + $0xd8] sm:$0xff]
    %v84 = vld [vmem:[#allocation2 + $0xe0] sm:$0xff]
    %v85 = vld [vmem:[#allocation2 + $0xe8] sm:$0xff]
    %v86 = vld [vmem:[#allocation2 + $0xf0] sm:$0xff]
    %v87 = vld [vmem:[#allocation2 + $0xf8] sm:$0xff]
    %v88 = vld [vmem:[#allocation2 + $0x100] sm:$0xff]
    %v89 = vld [vmem:[#allocation2 + $0x108] sm:$0xff]
    %v90 = vld [vmem:[#allocation2 + $0x110] sm:$0xff]
    %v91 = vld [vmem:[#allocation2 + $0x118] sm:$0xff]
    %v92 = vld [vmem:[#allocation2 + $0x120] sm:$0xff]
    %v93 = vld [vmem:[#allocation2 + $0x128] sm:$0xff]
    %v94 = vld [vmem:[#allocation2 + $0x130] sm:$0xff]
    %v95 = vld [vmem:[#allocation2 + $0x138] sm:$0xff]
    %v96 = vld [vmem:[#allocation2 + $0x140] sm:$0xff]
    %v97 = vld [vmem:[#allocation2 + $0x148] sm:$0xff]
    %v98 = vld [vmem:[#allocation2 + $0x150] sm:$0xff]
    %v99 = vld [vmem:[#allocation2 + $0x158] sm:$0xff]
    %v100 = vld [vmem:[#allocation2 + $0x160] sm:$0xff]
    %v101 = vld [vmem:[#allocation2 + $0x168] sm:$0xff]
    %v102 = vld [vmem:[#allocation2 + $0x170] sm:$0xff]
    %v103 = vld [vmem:[#allocation2 + $0x178] sm:$0xff]
    %v104 = vld [vmem:[#allocation2 + $0x180] sm:$0xff]
    %v105 = vld [vmem:[#allocation2 + $0x188] sm:$0xff]
    %v106 = vld [vmem:[#allocation2 + $0x190] sm:$0xff]
    %v107 = vld [vmem:[#allocation2 + $0x198] sm:$0xff]
    %v108 = vld [vmem:[#allocation2 + $0x1a0] sm:$0xff]
    %v109 = vld [vmem:[#allocation2 + $0x1a8] sm:$0xff]
    %v110 = vld [vmem:[#allocation2 + $0x1b0] sm:$0xff]
    %v111 = vld [vmem:[#allocation2 + $0x1b8] sm:$0xff]
    %v112 = vld [vmem:[#allocation2 + $0x1c0] sm:$0xff]
    %v113 = vld [vmem:[#allocation2 + $0x1c8] sm:$0xff]
    %v114 = vld [vmem:[#allocation2 + $0x1d0] sm:$0xff]
    %v115 = vld [vmem:[#allocation2 + $0x1d8] sm:$0xff]
    %v116 = vld [vmem:[#allocation2 + $0x1e0] sm:$0xff]
    %v117 = vld [vmem:[#allocation2 + $0x1e8] sm:$0xff]
    %v118 = vld [vmem:[#allocation2 + $0x1f0] sm:$0xff]
    %v119 = vld [vmem:[#allocation2 + $0x1f8] sm:$0xff]
    %v120 = vld [vmem:[#allocation2 + $0x200] sm:$0xff]
    %v121 = vld [vmem:[#allocation2 + $0x208] sm:$0xff]
    %v122 = vld [vmem:[#allocation2 + $0x210] sm:$0xff]
    %v123 = vld [vmem:[#allocation2 + $0x218] sm:$0xff]
    %v124 = vld [vmem:[#allocation2 + $0x220] sm:$0xff]
    %v125 = vld [vmem:[#allocation2 + $0x228] sm:$0xff]
    %v126 = vld [vmem:[#allocation2 + $0x230] sm:$0xff]
    %v127 = vld [vmem:[#allocation2 + $0x238] sm:$0xff]
    %v128 = vld [vmem:[#allocation2 + $0x240] sm:$0xff]
    %v129 = vld [vmem:[#allocation2 + $0x248] sm:$0xff]
    %v130 = vld [vmem:[#allocation2 + $0x250] sm:$0xff]
    %v131 = vld [vmem:[#allocation2 + $0x258] sm:$0xff]
    %v132 = vld [vmem:[#allocation2 + $0x260] sm:$0xff]
    %v133 = vld [vmem:[#allocation2 + $0x268] sm:$0xff]
    %v134 = vld [vmem:[#allocation2 + $0x270] sm:$0xff]
    %v135 = vld [vmem:[#allocation2 + $0x278] sm:$0xff]
    %v136 = vld [vmem:[#allocation2 + $0x280] sm:$0xff]
    %v137 = vld [vmem:[#allocation2 + $0x288] sm:$0xff]
    %v138 = vld [vmem:[#allocation2 + $0x290] sm:$0xff]
    %v139 = vld [vmem:[#allocation2 + $0x298] sm:$0xff]
    %v140 = vld [vmem:[#allocation2 + $0x2a0] sm:$0xff]
    %v141 = vld [vmem:[#allocation2 + $0x2a8] sm:$0xff]
    %v142 = vld [vmem:[#allocation2 + $0x2b0] sm:$0xff]
    %v143 = vld [vmem:[#allocation2 + $0x2b8] sm:$0xff]
    %v144 = vld [vmem:[#allocation2 + $0x2c0] sm:$0xff]
    %v145 = vld [vmem:[#allocation2 + $0x2c8] sm:$0xff]
    %v146 = vld [vmem:[#allocation2 + $0x2d0] sm:$0xff]
    %v147 = vld [vmem:[#allocation2 + $0x2d8] sm:$0xff]
    %v148 = vld [vmem:[#allocation2 + $0x2e0] sm:$0xff]
    %v149 = vld [vmem:[#allocation2 + $0x2e8] sm:$0xff]
    %v150 = vld [vmem:[#allocation2 + $0x2f0] sm:$0xff]
    %v151 = vld [vmem:[#allocation2 + $0x2f8] sm:$0xff]
    %v154 = vunpack.c.l.b16 %v50
    %v155 = vunpack.c.h.b16 %v50
    %v156 = vunpack.c.l.b16 %v51
    %v157 = vunpack.c.h.b16 %v51
    %v158 = vpack.c.b16 %v156, %v154
    %v159 = vpack.c.b16 %v157, %v155
    %v258 = vunpack.c.l.b16 %v56
    %v259 = vunpack.c.h.b16 %v56
    %v260 = vunpack.c.l.b16 %v57
    %v261 = vunpack.c.h.b16 %v57
    %v262 = vunpack.c.l.b16 %v58
    %v263 = vunpack.c.h.b16 %v58
    %v264 = vunpack.c.l.b16 %v59
    %v265 = vunpack.c.h.b16 %v59
    %v266 = vunpack.c.l.b16 %v60
    %v267 = vunpack.c.h.b16 %v60
    %v268 = vunpack.c.l.b16 %v61
    %v269 = vunpack.c.h.b16 %v61
    %v270 = vunpack.c.l.b16 %v62
    %v271 = vunpack.c.h.b16 %v62
    %v272 = vunpack.c.l.b16 %v63
    %v273 = vunpack.c.h.b16 %v63
    %v274 = vunpack.c.l.b16 %v64
    %v275 = vunpack.c.h.b16 %v64
    %v276 = vunpack.c.l.b16 %v65
    %v277 = vunpack.c.h.b16 %v65
    %v278 = vunpack.c.l.b16 %v66
    %v279 = vunpack.c.h.b16 %v66
    %v280 = vunpack.c.l.b16 %v67
    %v281 = vunpack.c.h.b16 %v67
    %v282 = vunpack.c.l.b16 %v68
    %v283 = vunpack.c.h.b16 %v68
    %v284 = vunpack.c.l.b16 %v69
    %v285 = vunpack.c.h.b16 %v69
    %v286 = vunpack.c.l.b16 %v70
    %v287 = vunpack.c.h.b16 %v70
    %v288 = vunpack.c.l.b16 %v71
    %v289 = vunpack.c.h.b16 %v71
    %v290 = vunpack.c.l.b16 %v72
    %v291 = vunpack.c.h.b16 %v72
    %v292 = vunpack.c.l.b16 %v73
    %v293 = vunpack.c.h.b16 %v73
    %v294 = vunpack.c.l.b16 %v74
    %v295 = vunpack.c.h.b16 %v74
    %v296 = vunpack.c.l.b16 %v75
    %v297 = vunpack.c.h.b16 %v75
    %v298 = vunpack.c.l.b16 %v76
    %v299 = vunpack.c.h.b16 %v76
    %v300 = vunpack.c.l.b16 %v77
    %v301 = vunpack.c.h.b16 %v77
    %v302 = vunpack.c.l.b16 %v78
    %v303 = vunpack.c.h.b16 %v78
    %v304 = vunpack.c.l.b16 %v79
    %v305 = vunpack.c.h.b16 %v79
    %v306 = vunpack.c.l.b16 %v80
    %v307 = vunpack.c.h.b16 %v80
    %v308 = vunpack.c.l.b16 %v81
    %v309 = vunpack.c.h.b16 %v81
    %v310 = vunpack.c.l.b16 %v82
    %v311 = vunpack.c.h.b16 %v82
    %v312 = vunpack.c.l.b16 %v83
    %v313 = vunpack.c.h.b16 %v83
    %v314 = vunpack.c.l.b16 %v84
    %v315 = vunpack.c.h.b16 %v84
    %v316 = vunpack.c.l.b16 %v85
    %v317 = vunpack.c.h.b16 %v85
    %v318 = vunpack.c.l.b16 %v86
    %v319 = vunpack.c.h.b16 %v86
    %v320 = vunpack.c.l.b16 %v87
    %v321 = vunpack.c.h.b16 %v87
    %v322 = vunpack.c.l.b16 %v88
    %v323 = vunpack.c.h.b16 %v88
    %v324 = vunpack.c.l.b16 %v89
    %v325 = vunpack.c.h.b16 %v89
    %v326 = vunpack.c.l.b16 %v90
    %v327 = vunpack.c.h.b16 %v90
    %v328 = vunpack.c.l.b16 %v91
    %v329 = vunpack.c.h.b16 %v91
    %v330 = vunpack.c.l.b16 %v92
    %v331 = vunpack.c.h.b16 %v92
    %v332 = vunpack.c.l.b16 %v93
    %v333 = vunpack.c.h.b16 %v93
    %v334 = vunpack.c.l.b16 %v94
    %v335 = vunpack.c.h.b16 %v94
    %v336 = vunpack.c.l.b16 %v95
    %v337 = vunpack.c.h.b16 %v95
    %v338 = vunpack.c.l.b16 %v96
    %v339 = vunpack.c.h.b16 %v96
    %v340 = vunpack.c.l.b16 %v97
    %v341 = vunpack.c.h.b16 %v97
    %v342 = vunpack.c.l.b16 %v98
    %v343 = vunpack.c.h.b16 %v98
    %v344 = vunpack.c.l.b16 %v99
    %v345 = vunpack.c.h.b16 %v99
    %v346 = vunpack.c.l.b16 %v100
    %v347 = vunpack.c.h.b16 %v100
    %v348 = vunpack.c.l.b16 %v101
    %v349 = vunpack.c.h.b16 %v101
    %v350 = vunpack.c.l.b16 %v102
    %v351 = vunpack.c.h.b16 %v102
    %v352 = vunpack.c.l.b16 %v103
    %v353 = vunpack.c.h.b16 %v103
    %v354 = vunpack.c.l.b16 %v104
    %v355 = vunpack.c.h.b16 %v104
    %v356 = vunpack.c.l.b16 %v105
    %v357 = vunpack.c.h.b16 %v105
    %v358 = vunpack.c.l.b16 %v106
    %v359 = vunpack.c.h.b16 %v106
    %v360 = vunpack.c.l.b16 %v107
    %v361 = vunpack.c.h.b16 %v107
    %v362 = vunpack.c.l.b16 %v108
    %v363 = vunpack.c.h.b16 %v108
    %v364 = vunpack.c.l.b16 %v109
    %v365 = vunpack.c.h.b16 %v109
    %v366 = vunpack.c.l.b16 %v110
    %v367 = vunpack.c.h.b16 %v110
    %v368 = vunpack.c.l.b16 %v111
    %v369 = vunpack.c.h.b16 %v111
    %v370 = vunpack.c.l.b16 %v112
    %v371 = vunpack.c.h.b16 %v112
    %v372 = vunpack.c.l.b16 %v113
    %v373 = vunpack.c.h.b16 %v113
    %v374 = vunpack.c.l.b16 %v114
    %v375 = vunpack.c.h.b16 %v114
    %v376 = vunpack.c.l.b16 %v115
    %v377 = vunpack.c.h.b16 %v115
    %v378 = vunpack.c.l.b16 %v116
    %v379 = vunpack.c.h.b16 %v116
    %v380 = vunpack.c.l.b16 %v117
    %v381 = vunpack.c.h.b16 %v117
    %v382 = vunpack.c.l.b16 %v118
    %v383 = vunpack.c.h.b16 %v118
    %v384 = vunpack.c.l.b16 %v119
    %v385 = vunpack.c.h.b16 %v119
    %v386 = vunpack.c.l.b16 %v120
    %v387 = vunpack.c.h.b16 %v120
    %v388 = vunpack.c.l.b16 %v121
    %v389 = vunpack.c.h.b16 %v121
    %v390 = vunpack.c.l.b16 %v122
    %v391 = vunpack.c.h.b16 %v122
    %v392 = vunpack.c.l.b16 %v123
    %v393 = vunpack.c.h.b16 %v123
    %v394 = vunpack.c.l.b16 %v124
    %v395 = vunpack.c.h.b16 %v124
    %v396 = vunpack.c.l.b16 %v125
    %v397 = vunpack.c.h.b16 %v125
    %v398 = vunpack.c.l.b16 %v126
    %v399 = vunpack.c.h.b16 %v126
    %v400 = vunpack.c.l.b16 %v127
    %v401 = vunpack.c.h.b16 %v127
    %v402 = vunpack.c.l.b16 %v128
    %v403 = vunpack.c.h.b16 %v128
    %v404 = vunpack.c.l.b16 %v129
    %v405 = vunpack.c.h.b16 %v129
    %v406 = vunpack.c.l.b16 %v130
    %v407 = vunpack.c.h.b16 %v130
    %v408 = vunpack.c.l.b16 %v131
    %v409 = vunpack.c.h.b16 %v131
    %v410 = vunpack.c.l.b16 %v132
    %v411 = vunpack.c.h.b16 %v132
    %v412 = vunpack.c.l.b16 %v133
    %v413 = vunpack.c.h.b16 %v133
    %v414 = vunpack.c.l.b16 %v134
    %v415 = vunpack.c.h.b16 %v134
    %v416 = vunpack.c.l.b16 %v135
    %v417 = vunpack.c.h.b16 %v135
    %v418 = vunpack.c.l.b16 %v136
    %v419 = vunpack.c.h.b16 %v136
    %v420 = vunpack.c.l.b16 %v137
    %v421 = vunpack.c.h.b16 %v137
    %v422 = vunpack.c.l.b16 %v138
    %v423 = vunpack.c.h.b16 %v138
    %v424 = vunpack.c.l.b16 %v139
    %v425 = vunpack.c.h.b16 %v139
    %v426 = vunpack.c.l.b16 %v140
    %v427 = vunpack.c.h.b16 %v140
    %v428 = vunpack.c.l.b16 %v141
    %v429 = vunpack.c.h.b16 %v141
    %v430 = vunpack.c.l.b16 %v142
    %v431 = vunpack.c.h.b16 %v142
    %v432 = vunpack.c.l.b16 %v143
    %v433 = vunpack.c.h.b16 %v143
    %v434 = vunpack.c.l.b16 %v144
    %v435 = vunpack.c.h.b16 %v144
    %v436 = vunpack.c.l.b16 %v145
    %v437 = vunpack.c.h.b16 %v145
    %v438 = vunpack.c.l.b16 %v146
    %v439 = vunpack.c.h.b16 %v146
    %v440 = vunpack.c.l.b16 %v147
    %v441 = vunpack.c.h.b16 %v147
    %v442 = vunpack.c.l.b16 %v148
    %v443 = vunpack.c.h.b16 %v148
    %v444 = vunpack.c.l.b16 %v149
    %v445 = vunpack.c.h.b16 %v149
    %v446 = vunpack.c.l.b16 %v150
    %v447 = vunpack.c.h.b16 %v150
    %v448 = vunpack.c.l.b16 %v151
    %v449 = vunpack.c.h.b16 %v151
    %v450 = vpack.c.b16 %v260, %v258
    %v451 = vpack.c.b16 %v261, %v259
    %v452 = vpack.c.b16 %v264, %v262
    %v453 = vpack.c.b16 %v265, %v263
    %v454 = vpack.c.b16 %v268, %v266
    %v455 = vpack.c.b16 %v269, %v267
    %v456 = vpack.c.b16 %v272, %v270
    %v457 = vpack.c.b16 %v273, %v271
    %v458 = vpack.c.b16 %v276, %v274
    %v459 = vpack.c.b16 %v277, %v275
    %v460 = vpack.c.b16 %v280, %v278
    %v461 = vpack.c.b16 %v281, %v279
    %v462 = vpack.c.b16 %v284, %v282
    %v463 = vpack.c.b16 %v285, %v283
    %v464 = vpack.c.b16 %v288, %v286
    %v465 = vpack.c.b16 %v289, %v287
    %v466 = vpack.c.b16 %v292, %v290
    %v467 = vpack.c.b16 %v293, %v291
    %v468 = vpack.c.b16 %v296, %v294
    %v469 = vpack.c.b16 %v297, %v295
    %v470 = vpack.c.b16 %v300, %v298
    %v471 = vpack.c.b16 %v301, %v299
    %v472 = vpack.c.b16 %v304, %v302
    %v473 = vpack.c.b16 %v305, %v303
    %v474 = vpack.c.b16 %v308, %v306
    %v475 = vpack.c.b16 %v309, %v307
    %v476 = vpack.c.b16 %v312, %v310
    %v477 = vpack.c.b16 %v313, %v311
    %v478 = vpack.c.b16 %v316, %v314
    %v479 = vpack.c.b16 %v317, %v315
    %v480 = vpack.c.b16 %v320, %v318
    %v481 = vpack.c.b16 %v321, %v319
    %v482 = vpack.c.b16 %v324, %v322
    %v483 = vpack.c.b16 %v325, %v323
    %v484 = vpack.c.b16 %v328, %v326
    %v485 = vpack.c.b16 %v329, %v327
    %v486 = vpack.c.b16 %v332, %v330
    %v487 = vpack.c.b16 %v333, %v331
    %v488 = vpack.c.b16 %v336, %v334
    %v489 = vpack.c.b16 %v337, %v335
    %v490 = vpack.c.b16 %v340, %v338
    %v491 = vpack.c.b16 %v341, %v339
    %v492 = vpack.c.b16 %v344, %v342
    %v493 = vpack.c.b16 %v345, %v343
    %v494 = vpack.c.b16 %v348, %v346
    %v495 = vpack.c.b16 %v349, %v347
    %v496 = vpack.c.b16 %v352, %v350
    %v497 = vpack.c.b16 %v353, %v351
    %v498 = vpack.c.b16 %v356, %v354
    %v499 = vpack.c.b16 %v357, %v355
    %v500 = vpack.c.b16 %v360, %v358
    %v501 = vpack.c.b16 %v361, %v359
    %v502 = vpack.c.b16 %v364, %v362
    %v503 = vpack.c.b16 %v365, %v363
    %v504 = vpack.c.b16 %v368, %v366
    %v505 = vpack.c.b16 %v369, %v367
    %v506 = vpack.c.b16 %v372, %v370
    %v507 = vpack.c.b16 %v373, %v371
    %v508 = vpack.c.b16 %v376, %v374
    %v509 = vpack.c.b16 %v377, %v375
    %v510 = vpack.c.b16 %v380, %v378
    %v511 = vpack.c.b16 %v381, %v379
    %v512 = vpack.c.b16 %v384, %v382
    %v513 = vpack.c.b16 %v385, %v383
    %v514 = vpack.c.b16 %v388, %v386
    %v515 = vpack.c.b16 %v389, %v387
    %v516 = vpack.c.b16 %v392, %v390
    %v517 = vpack.c.b16 %v393, %v391
    %v518 = vpack.c.b16 %v396, %v394
    %v519 = vpack.c.b16 %v397, %v395
    %v520 = vpack.c.b16 %v400, %v398
    %v521 = vpack.c.b16 %v401, %v399
    %v522 = vpack.c.b16 %v404, %v402
    %v523 = vpack.c.b16 %v405, %v403
    %v524 = vpack.c.b16 %v408, %v406
    %v525 = vpack.c.b16 %v409, %v407
    %v526 = vpack.c.b16 %v412, %v410
    %v527 = vpack.c.b16 %v413, %v411
    %v528 = vpack.c.b16 %v416, %v414
    %v529 = vpack.c.b16 %v417, %v415
    %v530 = vpack.c.b16 %v420, %v418
    %v531 = vpack.c.b16 %v421, %v419
    %v532 = vpack.c.b16 %v424, %v422
    %v533 = vpack.c.b16 %v425, %v423
    %v534 = vpack.c.b16 %v428, %v426
    %v535 = vpack.c.b16 %v429, %v427
    %v536 = vpack.c.b16 %v432, %v430
    %v537 = vpack.c.b16 %v433, %v431
    %v538 = vpack.c.b16 %v436, %v434
    %v539 = vpack.c.b16 %v437, %v435
    %v540 = vpack.c.b16 %v440, %v438
    %v541 = vpack.c.b16 %v441, %v439
    %v542 = vpack.c.b16 %v444, %v442
    %v543 = vpack.c.b16 %v445, %v443
    %v544 = vpack.c.b16 %v448, %v446
    %v545 = vpack.c.b16 %v449, %v447
    %642 = vmatprep.subr.bf16.mxu0 %v451
    %643 = vmatpush1.bf16.xpose.msra.mxu0 %v450
    %644 = vmatprep.subr.bf16.mxu0 %v453
    %645 = vmatpush1.bf16.xpose.msra.mxu0 %v452
    %646 = vmatprep.subr.bf16.mxu0 %v455
    %647 = vmatpush1.bf16.xpose.msra.mxu0 %v454
    %648 = vmatprep.subr.bf16.mxu0 %v457
    %649 = vmatpush1.bf16.xpose.msra.mxu0 %v456
    %650 = vmatprep.subr.bf16.mxu0 %v459
    %651 = vmatpush1.bf16.xpose.msra.mxu0 %v458
    %652 = vmatprep.subr.bf16.mxu0 %v461
    %653 = vmatpush1.bf16.xpose.msra.mxu0 %v460
    %654 = vmatprep.subr.bf16.mxu0 %v463
    %655 = vmatpush1.bf16.xpose.msra.mxu0 %v462
    %656 = vmatprep.subr.bf16.mxu0 %v465
    %657 = vmatpush1.bf16.xpose.msra.mxu0 %v464
    %658 = vmatprep.subr.bf16.mxu0 %v467
    %659 = vmatpush1.bf16.xpose.msra.mxu0 %v466
    %660 = vmatprep.subr.bf16.mxu0 %v469
    %661 = vmatpush1.bf16.xpose.msra.mxu0 %v468
    %662 = vmatprep.subr.bf16.mxu0 %v471
    %663 = vmatpush1.bf16.xpose.msra.mxu0 %v470
    %664 = vmatprep.subr.bf16.mxu0 %v473
    %665 = vmatpush1.bf16.xpose.msra.mxu0 %v472
    %666 = vmatprep.subr.bf16.mxu0 %v475
    %667 = vmatpush1.bf16.xpose.msra.mxu0 %v474
    %668 = vmatprep.subr.bf16.mxu0 %v477
    %669 = vmatpush1.bf16.xpose.msra.mxu0 %v476
    %670 = vmatprep.subr.bf16.mxu0 %v479
    %671 = vmatpush1.bf16.xpose.msra.mxu0 %v478
    %672 = vmatprep.subr.bf16.mxu0 %v481
    %673 = vmatpush1.bf16.xpose.msra.mxu0 %v480
    %674 = vmatprep.mubr.bf16.mxu0 %v159
    %675 = vmatmul.mubr.bf16.gmra.mrb[0].mxu0 %v158
    %v676 = vpop.f32.mrb[0].mxu0
    %v677 = vadd.f32 0.0, %v676
    %v678 = vpop.f32.mrb[0].mxu0
    %v679 = vadd.f32 0.0, %v678
    %v680 = vpop.f32.mrb[0].mxu0
    %v681 = vadd.f32 0.0, %v680
    %v682 = vpop.f32.mrb[0].mxu0
    %v683 = vadd.f32 0.0, %v682
    %684 = vdwg.mxu0
    %685 = vmatprep.subr.bf16.mxu0 %v483
    %686 = vmatpush1.bf16.xpose.msra.mxu0 %v482
    %687 = vmatprep.subr.bf16.mxu0 %v485
    %688 = vmatpush1.bf16.xpose.msra.mxu0 %v484
    %689 = vmatprep.subr.bf16.mxu0 %v487
    %690 = vmatpush1.bf16.xpose.msra.mxu0 %v486
    %691 = vmatprep.subr.bf16.mxu0 %v489
    %692 = vmatpush1.bf16.xpose.msra.mxu0 %v488
    %693 = vmatprep.subr.bf16.mxu0 %v491
    %694 = vmatpush1.bf16.xpose.msra.mxu0 %v490
    %695 = vmatprep.subr.bf16.mxu0 %v493
    %696 = vmatpush1.bf16.xpose.msra.mxu0 %v492
    %697 = vmatprep.subr.bf16.mxu0 %v495
    %698 = vmatpush1.bf16.xpose.msra.mxu0 %v494
    %699 = vmatprep.subr.bf16.mxu0 %v497
    %700 = vmatpush1.bf16.xpose.msra.mxu0 %v496
    %701 = vmatprep.subr.bf16.mxu0 %v499
    %702 = vmatpush1.bf16.xpose.msra.mxu0 %v498
    %703 = vmatprep.subr.bf16.mxu0 %v501
    %704 = vmatpush1.bf16.xpose.msra.mxu0 %v500
    %705 = vmatprep.subr.bf16.mxu0 %v503
    %706 = vmatpush1.bf16.xpose.msra.mxu0 %v502
    %707 = vmatprep.subr.bf16.mxu0 %v505
    %708 = vmatpush1.bf16.xpose.msra.mxu0 %v504
    %709 = vmatprep.subr.bf16.mxu0 %v507
    %710 = vmatpush1.bf16.xpose.msra.mxu0 %v506
    %711 = vmatprep.subr.bf16.mxu0 %v509
    %712 = vmatpush1.bf16.xpose.msra.mxu0 %v508
    %713 = vmatprep.subr.bf16.mxu0 %v511
    %714 = vmatpush1.bf16.xpose.msra.mxu0 %v510
    %715 = vmatprep.subr.bf16.mxu0 %v513
    %716 = vmatpush1.bf16.xpose.msra.mxu0 %v512
    %717 = vmatprep.mubr.bf16.mxu0 %v159
    %718 = vmatmul.mubr.bf16.gmra.mrb[0].mxu0 %v158
    %v719 = vpop.f32.mrb[0].mxu0
    %v720 = vadd.f32 0.0, %v719
    %v721 = vpop.f32.mrb[0].mxu0
    %v722 = vadd.f32 0.0, %v721
    %v723 = vpop.f32.mrb[0].mxu0
    %v724 = vadd.f32 0.0, %v723
    %v725 = vpop.f32.mrb[0].mxu0
    %v726 = vadd.f32 0.0, %v725
    %727 = vdwg.mxu0
    %728 = vmatprep.subr.bf16.mxu0 %v515
    %729 = vmatpush1.bf16.xpose.msra.mxu0 %v514
    %730 = vmatprep.subr.bf16.mxu0 %v517
    %731 = vmatpush1.bf16.xpose.msra.mxu0 %v516
    %732 = vmatprep.subr.bf16.mxu0 %v519
    %733 = vmatpush1.bf16.xpose.msra.mxu0 %v518
    %734 = vmatprep.subr.bf16.mxu0 %v521
    %735 = vmatpush1.bf16.xpose.msra.mxu0 %v520
    %736 = vmatprep.subr.bf16.mxu0 %v523
    %737 = vmatpush1.bf16.xpose.msra.mxu0 %v522
    %738 = vmatprep.subr.bf16.mxu0 %v525
    %739 = vmatpush1.bf16.xpose.msra.mxu0 %v524
    %740 = vmatprep.subr.bf16.mxu0 %v527
    %741 = vmatpush1.bf16.xpose.msra.mxu0 %v526
    %742 = vmatprep.subr.bf16.mxu0 %v529
    %743 = vmatpush1.bf16.xpose.msra.mxu0 %v528
    %744 = vmatprep.subr.bf16.mxu0 %v531
    %745 = vmatpush1.bf16.xpose.msra.mxu0 %v530
    %746 = vmatprep.subr.bf16.mxu0 %v533
    %747 = vmatpush1.bf16.xpose.msra.mxu0 %v532
    %748 = vmatprep.subr.bf16.mxu0 %v535
    %749 = vmatpush1.bf16.xpose.msra.mxu0 %v534
    %750 = vmatprep.subr.bf16.mxu0 %v537
    %751 = vmatpush1.bf16.xpose.msra.mxu0 %v536
    %752 = vmatprep.subr.bf16.mxu0 %v539
    %753 = vmatpush1.bf16.xpose.msra.mxu0 %v538
    %754 = vmatprep.subr.bf16.mxu0 %v541
    %755 = vmatpush1.bf16.xpose.msra.mxu0 %v540
    %756 = vmatprep.subr.bf16.mxu0 %v543
    %757 = vmatpush1.bf16.xpose.msra.mxu0 %v542
    %758 = vmatprep.subr.bf16.mxu0 %v545
    %759 = vmatpush1.bf16.xpose.msra.mxu0 %v544
    %760 = vmatprep.mubr.bf16.mxu0 %v159
    %761 = vmatmul.mubr.bf16.gmra.mrb[0].mxu0 %v158
    %v762 = vpop.f32.mrb[0].mxu0
    %v763 = vadd.f32 0.0, %v762
    %v764 = vpop.f32.mrb[0].mxu0
    %v765 = vadd.f32 0.0, %v764
    %v766 = vpop.f32.mrb[0].mxu0
    %v767 = vadd.f32 0.0, %v766
    %v768 = vpop.f32.mrb[0].mxu0
    %v769 = vadd.f32 0.0, %v768
    %770 = vdwg.mxu0
    %v771 = vmul.f32 %v677, %v52
    %v772 = vmul.f32 %v681, %v53
    %773 = vrot.lane.b32.xlu0 %v677, 64
    %v774 = vpop.permute.xlu0 %773
    %775 = vrot.lane.b32.xlu0 %v681, 64
    %v776 = vpop.permute.xlu0 %775
    %v777 = vmul.f32 %v774, %v54
    %v778 = vmul.f32 %v776, %v55
    %v779 = vadd.f32 %v771, %v777
    %v780 = vadd.f32 %v772, %v778
    %v781 = vmul.f32 %v720, %v52
    %v782 = vmul.f32 %v724, %v53
    %783 = vrot.lane.b32.xlu0 %v720, 64
    %v784 = vpop.permute.xlu0 %783
    %785 = vrot.lane.b32.xlu0 %v724, 64
    %v786 = vpop.permute.xlu0 %785
    %v787 = vmul.f32 %v784, %v54
    %v788 = vmul.f32 %v786, %v55
    %v789 = vadd.f32 %v781, %v787
    %v790 = vadd.f32 %v782, %v788
    %v791 = vmul.f32 %v679, %v52
    %v792 = vmul.f32 %v683, %v53
    %793 = vrot.lane.b32.xlu0 %v679, 64
    %v794 = vpop.permute.xlu0 %793
    %795 = vrot.lane.b32.xlu0 %v683, 64
    %v796 = vpop.permute.xlu0 %795
    %v797 = vmul.f32 %v794, %v54
    %v798 = vmul.f32 %v796, %v55
    %v799 = vadd.f32 %v791, %v797
    %v800 = vadd.f32 %v792, %v798
    %v801 = vmul.f32 %v722, %v52
    %v802 = vmul.f32 %v726, %v53
    %803 = vrot.lane.b32.xlu0 %v722, 64
    %v804 = vpop.permute.xlu0 %803
    %805 = vrot.lane.b32.xlu0 %v726, 64
    %v806 = vpop.permute.xlu0 %805
    %v807 = vmul.f32 %v804, %v54
    %v808 = vmul.f32 %v806, %v55
    %v809 = vadd.f32 %v801, %v807
    %v810 = vadd.f32 %v802, %v808
    %v811 = vpack.c.bf16 %v780, %v779
    %v812 = vpack.c.bf16 %v800, %v799
    %v813 = vpack.c.bf16 %v790, %v789
    %v814 = vpack.c.bf16 %v810, %v809
    %v815 = vpack.c.bf16 %v767, %v763
    %v816 = vpack.c.bf16 %v769, %v765
    %817 = vmatprep.subr.bf16.mxu0 0
    %818 = vmatpush1.bf16.xpose.msra.mxu0 %v813
    %819 = vmatprep.subr.bf16.mxu0 0
    %820 = vmatpush1.bf16.xpose.msra.mxu0 %v814
    %821 = vmatprep.subr.bf16.mxu0 0
    %822 = vmatpush1.bf16.xpose.msra.mxu0 0
    %823 = vmatprep.subr.bf16.mxu0 0
    %824 = vmatpush1.bf16.xpose.msra.mxu0 0
    %825 = vmatprep.subr.bf16.mxu0 0
    %826 = vmatpush1.bf16.xpose.msra.mxu0 0
    %827 = vmatprep.subr.bf16.mxu0 0
    %828 = vmatpush1.bf16.xpose.msra.mxu0 0
    %829 = vmatprep.subr.bf16.mxu0 0
    %830 = vmatpush1.bf16.xpose.msra.mxu0 0
    %831 = vmatprep.subr.bf16.mxu0 0
    %832 = vmatpush1.bf16.xpose.msra.mxu0 0
    %833 = vmatprep.subr.bf16.mxu0 0
    %834 = vmatpush1.bf16.xpose.msra.mxu0 0
    %835 = vmatprep.subr.bf16.mxu0 0
    %836 = vmatpush1.bf16.xpose.msra.mxu0 0
    %837 = vmatprep.subr.bf16.mxu0 0
    %838 = vmatpush1.bf16.xpose.msra.mxu0 0
    %839 = vmatprep.subr.bf16.mxu0 0
    %840 = vmatpush1.bf16.xpose.msra.mxu0 0
    %841 = vmatprep.subr.bf16.mxu0 0
    %842 = vmatpush1.bf16.xpose.msra.mxu0 0
    %843 = vmatprep.subr.bf16.mxu0 0
    %844 = vmatpush1.bf16.xpose.msra.mxu0 0
    %845 = vmatprep.subr.bf16.mxu0 0
    %846 = vmatpush1.bf16.xpose.msra.mxu0 0
    %847 = vmatprep.subr.bf16.mxu0 0
    %848 = vmatpush1.bf16.xpose.msra.mxu0 0
    %849 = vmatprep.mubr.bf16.mxu0 0
    %850 = vmatmul.mubr.bf16.gmra.mrb[0].mxu0 %v811
    %v851 = vpop.f32.mrb[0].mxu0
    %v852 = vadd.f32 0.0, %v851
    %v853 = vpop.f32.mrb[0].mxu0
    %v854 = vpop.f32.mrb[0].mxu0
    %v855 = vadd.f32 0.0, %v854
    %v856 = vpop.f32.mrb[0].mxu0
    %857 = vmatprep.mubr.bf16.mxu0 0
    %858 = vmatmul.mubr.bf16.gmra.mrb[0].mxu0 %v812
    %v859 = vpop.f32.mrb[0].mxu0
    %v860 = vadd.f32 0.0, %v859
    %v861 = vpop.f32.mrb[0].mxu0
    %v862 = vpop.f32.mrb[0].mxu0
    %v863 = vadd.f32 0.0, %v862
    %v864 = vpop.f32.mrb[0].mxu0
    %865 = vdwg.mxu0
    %v866 = vlaneseq
    %v867 = vshrl.u32 %v866, 7
    %v868 = vadd.s32 %v867, 8
    %v869 = vadd.s32 %v867, 16
    %v870 = vadd.s32 %v867, 24
    %v871 = vlaneseq
    %v872 = vand.u32 %v871, 127
    %v873 = vshra.s32 %v867, 3
    %v874 = vshra.s32 %v868, 3
    %v875 = vshra.s32 %v869, 3
    %v876 = vshra.s32 %v870, 3
    %v877 = vshra.s32 %v872, 3
    %vm878 = vcmp.eq.s32.totalorder %v873, %v877
    %vm879 = vcmp.eq.s32.totalorder %v874, %v877
    %vm880 = vcmp.eq.s32.totalorder %v875, %v877
    %vm881 = vcmp.eq.s32.totalorder %v876, %v877
    %vm882 = vcmp.ge.s32.totalorder %v867, %v872
    %vm883 = vcmp.ge.s32.totalorder %v868, %v872
    %vm884 = vcmp.ge.s32.totalorder %v869, %v872
    %vm885 = vcmp.ge.s32.totalorder %v870, %v872
    %vm886 = vmand %vm878, %vm882
    %vm887 = vmand %vm879, %vm883
    %vm888 = vmand %vm880, %vm884
    %vm889 = vmand %vm881, %vm885
    %v890 = vsel %vm886, %v852, -1e+30
    %v891 = vsel %vm887, %v855, -1e+30
    %v892 = vsel %vm888, %v860, -1e+30
    %v893 = vsel %vm889, %v863, -1e+30
    %vm894 = vcmask 261120
    %v895 = vsel %vm894, %v890, -inf
    %896 = vmax.xlane.f32.xlu0 %v895
    %v897 = vpop.xlane.xlu0 %896
    %v898 = vsel %vm894, %v891, -inf
    %899 = vmax.xlane.f32.xlu0 %v898
    %v900 = vpop.xlane.xlu0 %899
    %v901 = vsel %vm894, %v892, -inf
    %902 = vmax.xlane.f32.xlu0 %v901
    %v903 = vpop.xlane.xlu0 %902
    %v904 = vsel %vm894, %v893, -inf
    %905 = vmax.xlane.f32.xlu0 %v904
    %v906 = vpop.xlane.xlu0 %905
    %v907 = vsub.f32 %v890, %v897
    %v908 = vsub.f32 %v891, %v900
    %v909 = vsub.f32 %v892, %v903
    %v910 = vsub.f32 %v893, %v906
    %v911 = vmul.f32 %v907, 1.442695
    %v912 = vpow.pop %v911
    %v913 = vmul.f32 %v908, 1.442695
    %v914 = vpow.pop %v913
    %v915 = vmul.f32 %v909, 1.442695
    %v916 = vpow.pop %v915
    %v917 = vmul.f32 %v910, 1.442695
    %v918 = vpow.pop %v917
    %v919 = vsel %vm894, %v912, 0.0
    %920 = vadd.xlane.f32.xlu0 %v919
    %v921 = vpop.xlane.xlu0 %920
    %v922 = vsel %vm894, %v914, 0.0
    %923 = vadd.xlane.f32.xlu0 %v922
    %v924 = vpop.xlane.xlu0 %923
    %v925 = vsel %vm894, %v916, 0.0
    %926 = vadd.xlane.f32.xlu0 %v925
    %v927 = vpop.xlane.xlu0 %926
    %v928 = vsel %vm894, %v918, 0.0
    %929 = vadd.xlane.f32.xlu0 %v928
    %v930 = vpop.xlane.xlu0 %929
    %v931 = vrcp.pop %v921
    %v932 = vmul.f32 %v912, %v931
    %v933 = vrcp.pop %v924
    %v934 = vmul.f32 %v914, %v933
    %v935 = vrcp.pop %v927
    %v936 = vmul.f32 %v916, %v935
    %v937 = vrcp.pop %v930
    %v938 = vmul.f32 %v918, %v937
    %v939 = vpack.c.bf16 %v934, %v932
    %v940 = vpack.c.bf16 %v938, %v936
    %v942 = vsel %vm894, %v939, 0
    %v945 = vsel %vm894, %v940, 0
    %947 = vmatprep.subr.bf16.mxu0 0
    %948 = vmatpush1.bf16.msra.mxu0 %v815
    %949 = vmatprep.subr.bf16.mxu0 0
    %950 = vmatpush1.bf16.msra.mxu0 %v816
    %951 = vmatprep.subr.bf16.mxu0 0
    %952 = vmatpush1.bf16.msra.mxu0 0
    %953 = vmatprep.subr.bf16.mxu0 0
    %954 = vmatpush1.bf16.msra.mxu0 0
    %955 = vmatprep.subr.bf16.mxu0 0
    %956 = vmatpush1.bf16.msra.mxu0 0
    %957 = vmatprep.subr.bf16.mxu0 0
    %958 = vmatpush1.bf16.msra.mxu0 0
    %959 = vmatprep.subr.bf16.mxu0 0
    %960 = vmatpush1.bf16.msra.mxu0 0
    %961 = vmatprep.subr.bf16.mxu0 0
    %962 = vmatpush1.bf16.msra.mxu0 0
    %963 = vmatprep.subr.bf16.mxu0 0
    %964 = vmatpush1.bf16.msra.mxu0 0
    %965 = vmatprep.subr.bf16.mxu0 0
    %966 = vmatpush1.bf16.msra.mxu0 0
    %967 = vmatprep.subr.bf16.mxu0 0
    %968 = vmatpush1.bf16.msra.mxu0 0
    %969 = vmatprep.subr.bf16.mxu0 0
    %970 = vmatpush1.bf16.msra.mxu0 0
    %971 = vmatprep.subr.bf16.mxu0 0
    %972 = vmatpush1.bf16.msra.mxu0 0
    %973 = vmatprep.subr.bf16.mxu0 0
    %974 = vmatpush1.bf16.msra.mxu0 0
    %975 = vmatprep.subr.bf16.mxu0 0
    %976 = vmatpush1.bf16.msra.mxu0 0
    %977 = vmatprep.subr.bf16.mxu0 0
    %978 = vmatpush1.bf16.msra.mxu0 0
    %979 = vmatprep.mubr.bf16.mxu0 0
    %980 = vmatmul.mubr.bf16.gmra.mrb[0].mxu0 %v942
    %v981 = vpop.f32.mrb[0].mxu0
    %v982 = vadd.f32 0.0, %v981
    %v983 = vpop.f32.mrb[0].mxu0
    %v984 = vpop.f32.mrb[0].mxu0
    %v985 = vadd.f32 0.0, %v984
    %v986 = vpop.f32.mrb[0].mxu0
    %987 = vmatprep.mubr.bf16.mxu0 0
    %988 = vmatmul.mubr.bf16.gmra.mrb[0].mxu0 %v945
    %v989 = vpop.f32.mrb[0].mxu0
    %v990 = vadd.f32 0.0, %v989
    %v991 = vpop.f32.mrb[0].mxu0
    %v992 = vpop.f32.mrb[0].mxu0
    %v993 = vadd.f32 0.0, %v992
    %v994 = vpop.f32.mrb[0].mxu0
    %995 = vdwg.mxu0
    %v996 = vpack.c.bf16 %v985, %v982
    %v997 = vpack.c.bf16 %v993, %v990
    %v998 = vld [vmem:[#allocation5] sm:$0xff]
    %v999 = vld [vmem:[#allocation5 + $0x8] sm:$0xff]
    %v1000 = vld [vmem:[#allocation5 + $0x10] sm:$0xff]
    %v1001 = vld [vmem:[#allocation5 + $0x18] sm:$0xff]
    %v1002 = vld [vmem:[#allocation5 + $0x20] sm:$0xff]
    %v1003 = vld [vmem:[#allocation5 + $0x28] sm:$0xff]
    %v1004 = vld [vmem:[#allocation5 + $0x30] sm:$0xff]
    %v1005 = vld [vmem:[#allocation5 + $0x38] sm:$0xff]
    %v1006 = vld [vmem:[#allocation5 + $0x40] sm:$0xff]
    %v1007 = vld [vmem:[#allocation5 + $0x48] sm:$0xff]
    %v1008 = vld [vmem:[#allocation5 + $0x50] sm:$0xff]
    %v1009 = vld [vmem:[#allocation5 + $0x58] sm:$0xff]
    %v1010 = vld [vmem:[#allocation5 + $0x60] sm:$0xff]
    %v1011 = vld [vmem:[#allocation5 + $0x68] sm:$0xff]
    %v1012 = vld [vmem:[#allocation5 + $0x70] sm:$0xff]
    %v1013 = vld [vmem:[#allocation5 + $0x78] sm:$0xff]
    %v1014 = vld [vmem:[#allocation5 + $0x80] sm:$0xff]
    %v1015 = vld [vmem:[#allocation5 + $0x88] sm:$0xff]
    %v1016 = vld [vmem:[#allocation5 + $0x90] sm:$0xff]
    %v1017 = vld [vmem:[#allocation5 + $0x98] sm:$0xff]
    %v1018 = vld [vmem:[#allocation5 + $0xa0] sm:$0xff]
    %v1019 = vld [vmem:[#allocation5 + $0xa8] sm:$0xff]
    %v1020 = vld [vmem:[#allocation5 + $0xb0] sm:$0xff]
    %v1021 = vld [vmem:[#allocation5 + $0xb8] sm:$0xff]
    %v1022 = vld [vmem:[#allocation5 + $0xc0] sm:$0xff]
    %v1023 = vld [vmem:[#allocation5 + $0xc8] sm:$0xff]
    %v1024 = vld [vmem:[#allocation5 + $0xd0] sm:$0xff]
    %v1025 = vld [vmem:[#allocation5 + $0xd8] sm:$0xff]
    %v1026 = vld [vmem:[#allocation5 + $0xe0] sm:$0xff]
    %v1027 = vld [vmem:[#allocation5 + $0xe8] sm:$0xff]
    %v1028 = vld [vmem:[#allocation5 + $0xf0] sm:$0xff]
    %v1029 = vld [vmem:[#allocation5 + $0xf8] sm:$0xff]
    %v1062 = vunpack.c.l.b16 %v998
    %v1063 = vunpack.c.h.b16 %v998
    %v1064 = vunpack.c.l.b16 %v999
    %v1065 = vunpack.c.h.b16 %v999
    %v1066 = vunpack.c.l.b16 %v1000
    %v1067 = vunpack.c.h.b16 %v1000
    %v1068 = vunpack.c.l.b16 %v1001
    %v1069 = vunpack.c.h.b16 %v1001
    %v1070 = vunpack.c.l.b16 %v1002
    %v1071 = vunpack.c.h.b16 %v1002
    %v1072 = vunpack.c.l.b16 %v1003
    %v1073 = vunpack.c.h.b16 %v1003
    %v1074 = vunpack.c.l.b16 %v1004
    %v1075 = vunpack.c.h.b16 %v1004
    %v1076 = vunpack.c.l.b16 %v1005
    %v1077 = vunpack.c.h.b16 %v1005
    %v1078 = vunpack.c.l.b16 %v1006
    %v1079 = vunpack.c.h.b16 %v1006
    %v1080 = vunpack.c.l.b16 %v1007
    %v1081 = vunpack.c.h.b16 %v1007
    %v1082 = vunpack.c.l.b16 %v1008
    %v1083 = vunpack.c.h.b16 %v1008
    %v1084 = vunpack.c.l.b16 %v1009
    %v1085 = vunpack.c.h.b16 %v1009
    %v1086 = vunpack.c.l.b16 %v1010
    %v1087 = vunpack.c.h.b16 %v1010
    %v1088 = vunpack.c.l.b16 %v1011
    %v1089 = vunpack.c.h.b16 %v1011
    %v1090 = vunpack.c.l.b16 %v1012
    %v1091 = vunpack.c.h.b16 %v1012
    %v1092 = vunpack.c.l.b16 %v1013
    %v1093 = vunpack.c.h.b16 %v1013
    %v1094 = vunpack.c.l.b16 %v1014
    %v1095 = vunpack.c.h.b16 %v1014
    %v1096 = vunpack.c.l.b16 %v1015
    %v1097 = vunpack.c.h.b16 %v1015
    %v1098 = vunpack.c.l.b16 %v1016
    %v1099 = vunpack.c.h.b16 %v1016
    %v1100 = vunpack.c.l.b16 %v1017
    %v1101 = vunpack.c.h.b16 %v1017
    %v1102 = vunpack.c.l.b16 %v1018
    %v1103 = vunpack.c.h.b16 %v1018
    %v1104 = vunpack.c.l.b16 %v1019
    %v1105 = vunpack.c.h.b16 %v1019
    %v1106 = vunpack.c.l.b16 %v1020
    %v1107 = vunpack.c.h.b16 %v1020
    %v1108 = vunpack.c.l.b16 %v1021
    %v1109 = vunpack.c.h.b16 %v1021
    %v1110 = vunpack.c.l.b16 %v1022
    %v1111 = vunpack.c.h.b16 %v1022
    %v1112 = vunpack.c.l.b16 %v1023
    %v1113 = vunpack.c.h.b16 %v1023
    %v1114 = vunpack.c.l.b16 %v1024
    %v1115 = vunpack.c.h.b16 %v1024
    %v1116 = vunpack.c.l.b16 %v1025
    %v1117 = vunpack.c.h.b16 %v1025
    %v1118 = vunpack.c.l.b16 %v1026
    %v1119 = vunpack.c.h.b16 %v1026
    %v1120 = vunpack.c.l.b16 %v1027
    %v1121 = vunpack.c.h.b16 %v1027
    %v1122 = vunpack.c.l.b16 %v1028
    %v1123 = vunpack.c.h.b16 %v1028
    %v1124 = vunpack.c.l.b16 %v1029
    %v1125 = vunpack.c.h.b16 %v1029
    %v1126 = vpack.c.b16 %v1064, %v1062
    %v1127 = vpack.c.b16 %v1065, %v1063
    %v1128 = vpack.c.b16 %v1068, %v1066
    %v1129 = vpack.c.b16 %v1069, %v1067
    %v1130 = vpack.c.b16 %v1072, %v1070
    %v1131 = vpack.c.b16 %v1073, %v1071
    %v1132 = vpack.c.b16 %v1076, %v1074
    %v1133 = vpack.c.b16 %v1077, %v1075
    %v1134 = vpack.c.b16 %v1080, %v1078
    %v1135 = vpack.c.b16 %v1081, %v1079
    %v1136 = vpack.c.b16 %v1084, %v1082
    %v1137 = vpack.c.b16 %v1085, %v1083
    %v1138 = vpack.c.b16 %v1088, %v1086
    %v1139 = vpack.c.b16 %v1089, %v1087
    %v1140 = vpack.c.b16 %v1092, %v1090
    %v1141 = vpack.c.b16 %v1093, %v1091
    %v1142 = vpack.c.b16 %v1096, %v1094
    %v1143 = vpack.c.b16 %v1097, %v1095
    %v1144 = vpack.c.b16 %v1100, %v1098
    %v1145 = vpack.c.b16 %v1101, %v1099
    %v1146 = vpack.c.b16 %v1104, %v1102
    %v1147 = vpack.c.b16 %v1105, %v1103
    %v1148 = vpack.c.b16 %v1108, %v1106
    %v1149 = vpack.c.b16 %v1109, %v1107
    %v1150 = vpack.c.b16 %v1112, %v1110
    %v1151 = vpack.c.b16 %v1113, %v1111
    %v1152 = vpack.c.b16 %v1116, %v1114
    %v1153 = vpack.c.b16 %v1117, %v1115
    %v1154 = vpack.c.b16 %v1120, %v1118
    %v1155 = vpack.c.b16 %v1121, %v1119
    %v1156 = vpack.c.b16 %v1124, %v1122
    %v1157 = vpack.c.b16 %v1125, %v1123
    %1190 = vmatprep.subr.bf16.mxu0 %v1127
    %1191 = vmatpush1.bf16.xpose.msra.mxu0 %v1126
    %1192 = vmatprep.subr.bf16.mxu0 %v1129
    %1193 = vmatpush1.bf16.xpose.msra.mxu0 %v1128
    %1194 = vmatprep.subr.bf16.mxu0 %v1131
    %1195 = vmatpush1.bf16.xpose.msra.mxu0 %v1130
    %1196 = vmatprep.subr.bf16.mxu0 %v1133
    %1197 = vmatpush1.bf16.xpose.msra.mxu0 %v1132
    %1198 = vmatprep.subr.bf16.mxu0 %v1135
    %1199 = vmatpush1.bf16.xpose.msra.mxu0 %v1134
    %1200 = vmatprep.subr.bf16.mxu0 %v1137
    %1201 = vmatpush1.bf16.xpose.msra.mxu0 %v1136
    %1202 = vmatprep.subr.bf16.mxu0 %v1139
    %1203 = vmatpush1.bf16.xpose.msra.mxu0 %v1138
    %1204 = vmatprep.subr.bf16.mxu0 %v1141
    %1205 = vmatpush1.bf16.xpose.msra.mxu0 %v1140
    %1206 = vmatprep.subr.bf16.mxu0 %v1143
    %1207 = vmatpush1.bf16.xpose.msra.mxu0 %v1142
    %1208 = vmatprep.subr.bf16.mxu0 %v1145
    %1209 = vmatpush1.bf16.xpose.msra.mxu0 %v1144
    %1210 = vmatprep.subr.bf16.mxu0 %v1147
    %1211 = vmatpush1.bf16.xpose.msra.mxu0 %v1146
    %1212 = vmatprep.subr.bf16.mxu0 %v1149
    %1213 = vmatpush1.bf16.xpose.msra.mxu0 %v1148
    %1214 = vmatprep.subr.bf16.mxu0 %v1151
    %1215 = vmatpush1.bf16.xpose.msra.mxu0 %v1150
    %1216 = vmatprep.subr.bf16.mxu0 %v1153
    %1217 = vmatpush1.bf16.xpose.msra.mxu0 %v1152
    %1218 = vmatprep.subr.bf16.mxu0 %v1155
    %1219 = vmatpush1.bf16.xpose.msra.mxu0 %v1154
    %1220 = vmatprep.subr.bf16.mxu0 %v1157
    %1221 = vmatpush1.bf16.xpose.msra.mxu0 %v1156
    %1222 = vmatprep.mubr.bf16.mxu0 %v997
    %1223 = vmatmul.mubr.bf16.gmra.mrb[0].mxu0 %v996
    %v1224 = vpop.f32.mrb[0].mxu0
    %v1225 = vadd.f32 0.0, %v1224
    %v1226 = vpop.f32.mrb[0].mxu0
    %v1227 = vadd.f32 0.0, %v1226
    %v1228 = vpop.f32.mrb[0].mxu0
    %v1229 = vadd.f32 0.0, %v1228
    %v1230 = vpop.f32.mrb[0].mxu0
    %v1231 = vadd.f32 0.0, %v1230
    %1232 = vdwg.mxu0
    %1233 = vst [vmem:[#allocation7] sm:$0xff] %v1225
    %1234 = vst [vmem:[#allocation7 + $0x8] sm:$0xff] %v1227
    %1235 = vst [vmem:[#allocation7 + $0x10] sm:$0xff] %v1229
    %1236 = vst [vmem:[#allocation7 + $0x18] sm:$0xff] %v1231
    // Predicated region
    $region30: #{carformer_attention_forward.1} parent=1 // pred_check
      _
    $region31: #{carformer_attention_forward.1} parent=1 // pred_check_branch
      %1238 = sbr.rel (0) target = $region33
    $region32: #{carformer_attention_forward.1} parent=1 // pred_region
      %s1240 = ssub.s32 512, 512
      %1241 = vsyncadd [#allocation4], %s1240
      %s1242 = sshll.u32 [#allocation7], 4
      %s1243 = int_to_ptr.vmem [resolvable:$true] %s1242
      %1248 = dma.vmem_to_hbm [thread:$0]  %s1243, 512, %s5, [#allocation4], 256, 256, 16
    $region33: #{carformer_attention_forward.1} parent=1 // pred_fallthru
      _
    // Predicated region
    $region34: #{carformer_attention_forward.1} parent=1 // pred_check
      _
    $region35: #{carformer_attention_forward.1} parent=1 // pred_check_branch
      %1250 = sbr.rel (0) target = $region37
    $region36: #{carformer_attention_forward.1} parent=1 // pred_region
      %1251 = dma.done [#allocation4], 512
    $region37: #{carformer_attention_forward.1} parent=1 // pred_fallthru
      _
    %1252 = vsyncpa [#allocation3], 1
    %1253 = vsyncpa [#allocation6], 1
    %1254 = vsyncpa [#allocation4], 1

</llo_original>
